<compile_context>
chip_gen: v6e
topology: v6e:2x2x1
jax: 0.10.0
libtpu: 0.0.40
codegen_flags: <defaults>
</compile_context>

<pallas_src>
import jax
import jax.numpy as jnp
from jax import lax
from jax.experimental import pallas as pl
from jax.experimental.pallas import tpu as pltpu

ALPHA = 0.9   # NLTK single_meteor_score defaults
BETA = 3.0
GAMMA = 0.5


def _meteor_kernel(hyp_ref, ref_ref, hlen_ref, rlen_ref, out_ref):
    # hyp_ref: [Lh_pad, TB] int32   (token position on sublanes, sentence on lanes)
    # ref_ref: [Lr_pad, TB] int32
    # hlen_ref/rlen_ref: [1, TB] int32
    # out_ref: [1, TB] float32 per-sentence METEOR scores
    Lh, TB = hyp_ref.shape
    Lr, _ = ref_ref.shape

    ref_toks = ref_ref[...]                                   # [Lr, TB] i32
    hlen = hlen_ref[...]                                      # [1, TB] i32
    rlen = rlen_ref[...]                                      # [1, TB] i32

    j_iota = lax.broadcasted_iota(jnp.int32, (Lr, TB), 0)     # ref position index
    ref_valid = j_iota < rlen                                 # [Lr, TB] bool

    def body(t, carry):
        matched, prev_has, prev_j, m_cnt, cont_cnt = carry
        i = Lh - 1 - t                                        # scan hyp last -> first (NLTK order)
        hrow = hyp_ref[pl.ds(i, 1), :]                        # [1, TB] i32
        cand = (ref_toks == hrow) & ref_valid & (~matched)    # [Lr, TB] bool
        midx = jnp.where(cand, j_iota, jnp.int32(-1))
        jmax = jnp.max(midx, axis=0, keepdims=True)           # largest unmatched ref idx, [1, TB]
        hyp_valid = i < hlen                                  # [1, TB] bool
        has = (jmax >= 0) & hyp_valid                         # this hyp position got a match
        matched = matched | (cand & (j_iota == jmax) & has)
        # chunk continuation (in ascending hyp order): hyp i and i+1 both matched
        # and their ref indices are consecutive.
        cont = has & prev_has & (prev_j == jmax + 1)
        m_cnt = m_cnt + has.astype(jnp.int32)
        cont_cnt = cont_cnt + cont.astype(jnp.int32)
        prev_j = jnp.where(has, jmax, jnp.int32(-1000000))
        return matched, has, prev_j, m_cnt, cont_cnt

    init = (
        jnp.zeros((Lr, TB), jnp.bool_),                       # matched ref positions
        jnp.zeros((1, TB), jnp.bool_),                        # prev_has
        jnp.full((1, TB), -1000000, jnp.int32),               # prev_j
        jnp.zeros((1, TB), jnp.int32),                        # match count
        jnp.zeros((1, TB), jnp.int32),                        # continuation count
    )
    _, _, _, m_cnt, cont_cnt = lax.fori_loop(0, Lh, body, init, unroll=(Lh <= 16))

    m = m_cnt.astype(jnp.float32)
    hl = jnp.maximum(hlen, 1).astype(jnp.float32)
    rl = jnp.maximum(rlen, 1).astype(jnp.float32)
    precision = m / hl
    recall = m / rl
    denom = jnp.maximum(ALPHA * precision + (1.0 - ALPHA) * recall, jnp.float32(1e-30))
    fmean = (precision * recall) / denom
    chunks = (m_cnt - cont_cnt).astype(jnp.float32)
    frag = chunks / jnp.maximum(m, 1.0)
    penalty = jnp.float32(GAMMA) * frag * frag * frag         # beta = 3
    score = jnp.where(m_cnt > 0, (1.0 - penalty) * fmean, 0.0)
    out_ref[...] = score.astype(jnp.float32)


def _round_up(x, m):
    return ((x + m - 1) // m) * m


def _meteor_scores_impl(ref_tok, ref_len, hyp_tok, hyp_len):
    """ref_tok: [B, Lr] int, hyp_tok: [B, Lh] int, lens: [B] int -> [B] f32 scores."""
    B, Lh = hyp_tok.shape
    _, Lr = ref_tok.shape
    TB = 128                                   # batch block = lane width (lane-dense)
    B_pad = _round_up(max(B, 1), TB)
    Lh_pad = _round_up(Lh, 8)
    Lr_pad = _round_up(Lr, 8)

    # Transpose to [L, B] so the kernel indexes token positions on the sublane
    # axis (dynamic sublane slice) and sentences sit on lanes.
    hyp_t = jnp.zeros((Lh_pad, B_pad), jnp.int32).at[:Lh, :B].set(
        jnp.transpose(hyp_tok.astype(jnp.int32)))
    ref_t = jnp.zeros((Lr_pad, B_pad), jnp.int32).at[:Lr, :B].set(
        jnp.transpose(ref_tok.astype(jnp.int32)))
    hlen = jnp.zeros((1, B_pad), jnp.int32).at[0, :B].set(hyp_len.astype(jnp.int32))
    rlen = jnp.zeros((1, B_pad), jnp.int32).at[0, :B].set(ref_len.astype(jnp.int32))

    out = pl.pallas_call(
        _meteor_kernel,
        out_shape=jax.ShapeDtypeStruct((1, B_pad), jnp.float32),
        grid_spec=pltpu.PrefetchScalarGridSpec(
            num_scalar_prefetch=0,
            grid=(B_pad // TB,),
            in_specs=[
                pl.BlockSpec((Lh_pad, TB), lambda b: (0, b)),
                pl.BlockSpec((Lr_pad, TB), lambda b: (0, b)),
                pl.BlockSpec((1, TB), lambda b: (0, b)),
                pl.BlockSpec((1, TB), lambda b: (0, b)),
            ],
            out_specs=pl.BlockSpec((1, TB), lambda b: (0, b)),
        ),
        compiler_params=pltpu.CompilerParams(
            dimension_semantics=("parallel",)),   # shard batch blocks across TCs (v7x)
    )(hyp_t, ref_t, hlen, rlen)
    return out[0, :B]


meteor_scores = jax.jit(_meteor_scores_impl)


class MeteorScorePallas:
    """Mirrors MeteorScore.forward for pre-tokenized (int id) inputs."""

    def __init__(self, digits=4):
        self.digits = digits

    def forward(self, refs_tok, refs_len, hyps_tok, hyps_len):
        if refs_tok.shape[0] != hyps_tok.shape[0]:
            scores = [0]
            return (round(sum(scores) / len(scores), self.digits), scores)
        dev_scores = meteor_scores(refs_tok, refs_len, hyps_tok, hyps_len)
        # Single host sync for API fidelity; callers that loop should consume
        # `meteor_scores` directly and keep results on device.
        host = jax.device_get(jax.block_until_ready(dev_scores))
        scores = [float(s) for s in host]
        return (round(sum(scores) / len(scores), self.digits), scores)


def _meteor_exact_match_ref(ref_toks, ref_len, hyp_toks, hyp_len,
                            alpha=ALPHA, beta=BETA, gamma=GAMMA):
    """Pure-Python exact-match METEOR matching NLTK's alignment order."""
    ref = list(ref_toks[:ref_len])
    hyp = list(hyp_toks[:hyp_len])
    unmatched_ref = list(range(len(ref)))
    matches = []
    for i in range(len(hyp) - 1, -1, -1):          # hyp last -> first
        for pos in range(len(unmatched_ref) - 1, -1, -1):   # largest ref index first
            j = unmatched_ref[pos]
            if ref[j] == hyp[i]:
                matches.append((i, j))
                unmatched_ref.pop(pos)
                break
    matches.sort(key=lambda p: p[0])
    m = len(matches)
    if m == 0 or len(hyp) == 0 or len(ref) == 0:
        return 0.0
    precision = m / len(hyp)
    recall = m / len(ref)
    denom = alpha * precision + (1 - alpha) * recall
    if denom == 0:
        return 0.0
    fmean = precision * recall / denom
    chunks = 1
    for k in range(m - 1):
        if not (matches[k + 1][0] == matches[k][0] + 1
                and matches[k + 1][1] == matches[k][1] + 1):
            chunks += 1
    frag = chunks / m
    penalty = gamma * frag ** beta
    return (1 - penalty) * fmean


if __name__ == "__main__":
    key = jax.random.PRNGKey(0)
    B, Lh, Lr, vocab = 2, 8, 8, 6
    k1, k2 = jax.random.split(key)
    hyp_tok = jax.random.randint(k1, (B, Lh), 0, vocab, dtype=jnp.int32)
    ref_tok = jax.random.randint(k2, (B, Lr), 0, vocab, dtype=jnp.int32)
    hyp_len = jnp.array([6, 8], dtype=jnp.int32)
    ref_len = jnp.array([8, 5], dtype=jnp.int32)

    scorer = MeteorScorePallas(digits=4)
    avg, scores = scorer.forward(ref_tok, ref_len, hyp_tok, hyp_len)

    ht, rt = jax.device_get(hyp_tok), jax.device_get(ref_tok)
    hl, rl = jax.device_get(hyp_len), jax.device_get(ref_len)
    ref_scores = [
        _meteor_exact_match_ref(rt[b].tolist(), int(rl[b]), ht[b].tolist(), int(hl[b]))
        for b in range(B)
    ]
    ref_avg = sum(ref_scores) / len(ref_scores)

    for s, r in zip(scores, ref_scores):
        assert abs(s - r) < 1e-4, (scores, ref_scores)
    assert abs(avg - round(ref_avg, 4)) < 1e-3, (avg, ref_avg)
    print("KERNEL_OK")
</pallas_src>

<mosaic_0001>
module attributes {stable_mosaic.version = 11 : i64} {
  func.func @_meteor_kernel(%arg0: i32, %arg1: memref<8x128xi32, #tpu.memory_space<vmem>>, %arg2: memref<8x128xi32, #tpu.memory_space<vmem>>, %arg3: memref<1x128xi32, #tpu.memory_space<vmem>>, %arg4: memref<1x128xi32, #tpu.memory_space<vmem>>, %arg5: memref<1x128xf32, #tpu.memory_space<vmem>>) attributes {dimension_semantics = [#tpu.dimension_semantics<parallel>], iteration_bounds = array<i64: 1>, scalar_prefetch = 0 : i64, scratch_operands = 0 : i64, tpu.core_type = #tpu.core_type<tc>, window_params = [{transform_indices = @transform_0, window_bounds = array<i64: 8, 128>}, {transform_indices = @transform_1, window_bounds = array<i64: 8, 128>}, {transform_indices = @transform_2, window_bounds = array<i64: 1, 128>}, {transform_indices = @transform_3, window_bounds = array<i64: 1, 128>}, {transform_indices = @transform_4, window_bounds = array<i64: 1, 128>}]} {
    %c0 = arith.constant 0 : index
    %c0_0 = arith.constant 0 : index
    %0 = vector.load %arg2[%c0, %c0_0] : memref<8x128xi32, #tpu.memory_space<vmem>>, vector<8x128xi32>
    %c0_1 = arith.constant 0 : index
    %c0_2 = arith.constant 0 : index
    %1 = vector.load %arg3[%c0_1, %c0_2] : memref<1x128xi32, #tpu.memory_space<vmem>>, vector<1x128xi32>
    %c0_3 = arith.constant 0 : index
    %c0_4 = arith.constant 0 : index
    %2 = vector.load %arg4[%c0_3, %c0_4] : memref<1x128xi32, #tpu.memory_space<vmem>>, vector<1x128xi32>
    %3 = tpu.iota {dimensions = array<i32: 0>} : vector<8x128xi32>
    %4 = vector.broadcast %2 : vector<1x128xi32> to vector<8x128xi32>
    %5 = arith.cmpi slt, %3, %4 : vector<8x128xi32>
    %false = arith.constant false
    %6 = vector.broadcast %false : i1 to vector<8x128xi1>
    %false_5 = arith.constant false
    %7 = vector.broadcast %false_5 : i1 to vector<1x128xi1>
    %c-1000000_i32 = arith.constant -1000000 : i32
    %8 = vector.broadcast %c-1000000_i32 : i32 to vector<1x128xi32>
    %c0_i32 = arith.constant 0 : i32
    %9 = vector.broadcast %c0_i32 : i32 to vector<1x128xi32>
    %c0_i32_6 = arith.constant 0 : i32
    %10 = vector.broadcast %c0_i32_6 : i32 to vector<1x128xi32>
    %c0_i32_7 = arith.constant 0 : i32
    %c7_i32 = arith.constant 7 : i32
    %11 = arith.subi %c7_i32, %c0_i32_7 : i32
    %12 = arith.index_cast %11 : i32 to index
    %c0_8 = arith.constant 0 : index
    %13 = vector.load %arg1[%12, %c0_8] : memref<8x128xi32, #tpu.memory_space<vmem>>, vector<1x128xi32>
    %14 = vector.broadcast %13 : vector<1x128xi32> to vector<8x128xi32>
    %15 = arith.cmpi eq, %0, %14 : vector<8x128xi32>
    %16 = arith.andi %15, %5 : vector<8x128xi1>
    %cst = arith.constant dense<true> : vector<8x128xi1>
    %17 = arith.xori %6, %cst : vector<8x128xi1>
    %18 = arith.andi %16, %17 : vector<8x128xi1>
    %c-1_i32 = arith.constant -1 : i32
    %19 = vector.broadcast %c-1_i32 : i32 to vector<8x128xi32>
    %20 = arith.select %18, %3, %19 : vector<8x128xi1>, vector<8x128xi32>
    %cst_9 = arith.constant dense<-2147483648> : vector<128xi32>
    %21 = vector.multi_reduction <maxsi>, %20, %cst_9 [0] : vector<8x128xi32> to vector<128xi32>
    %22 = vector.shape_cast %21 : vector<128xi32> to vector<1x128xi32>
    %23 = vector.broadcast %11 : i32 to vector<1x128xi32>
    %24 = arith.cmpi slt, %23, %1 : vector<1x128xi32>
    %c0_i32_10 = arith.constant 0 : i32
    %25 = vector.broadcast %c0_i32_10 : i32 to vector<1x128xi32>
    %26 = arith.cmpi sge, %22, %25 : vector<1x128xi32>
    %27 = arith.andi %26, %24 : vector<1x128xi1>
    %28 = vector.broadcast %22 : vector<1x128xi32> to vector<8x128xi32>
    %29 = arith.cmpi eq, %3, %28 : vector<8x128xi32>
    %30 = arith.andi %18, %29 : vector<8x128xi1>
    %31 = vector.broadcast %27 : vector<1x128xi1> to vector<8x128xi1>
    %32 = arith.andi %30, %31 : vector<8x128xi1>
    %33 = arith.ori %6, %32 : vector<8x128xi1>
    %34 = arith.andi %27, %7 : vector<1x128xi1>
    %c1_i32 = arith.constant 1 : i32
    %35 = vector.broadcast %c1_i32 : i32 to vector<1x128xi32>
    %36 = arith.addi %22, %35 : vector<1x128xi32>
    %37 = arith.cmpi eq, %8, %36 : vector<1x128xi32>
    %38 = arith.andi %34, %37 : vector<1x128xi1>
    %39 = arith.extui %27 : vector<1x128xi1> to vector<1x128xi32>
    %40 = arith.addi %9, %39 : vector<1x128xi32>
    %41 = arith.extui %38 : vector<1x128xi1> to vector<1x128xi32>
    %42 = arith.addi %10, %41 : vector<1x128xi32>
    %c-1000000_i32_11 = arith.constant -1000000 : i32
    %43 = vector.broadcast %c-1000000_i32_11 : i32 to vector<1x128xi32>
    %44 = arith.select %27, %22, %43 : vector<1x128xi1>, vector<1x128xi32>
    %c1_i32_12 = arith.constant 1 : i32
    %c7_i32_13 = arith.constant 7 : i32
    %45 = arith.subi %c7_i32_13, %c1_i32_12 : i32
    %46 = arith.index_cast %45 : i32 to index
    %c0_14 = arith.constant 0 : index
    %47 = vector.load %arg1[%46, %c0_14] : memref<8x128xi32, #tpu.memory_space<vmem>>, vector<1x128xi32>
    %48 = vector.broadcast %47 : vector<1x128xi32> to vector<8x128xi32>
    %49 = arith.cmpi eq, %0, %48 : vector<8x128xi32>
    %50 = arith.andi %49, %5 : vector<8x128xi1>
    %cst_15 = arith.constant dense<true> : vector<8x128xi1>
    %51 = arith.xori %33, %cst_15 : vector<8x128xi1>
    %52 = arith.andi %50, %51 : vector<8x128xi1>
    %c-1_i32_16 = arith.constant -1 : i32
    %53 = vector.broadcast %c-1_i32_16 : i32 to vector<8x128xi32>
    %54 = arith.select %52, %3, %53 : vector<8x128xi1>, vector<8x128xi32>
    %cst_17 = arith.constant dense<-2147483648> : vector<128xi32>
    %55 = vector.multi_reduction <maxsi>, %54, %cst_17 [0] : vector<8x128xi32> to vector<128xi32>
    %56 = vector.shape_cast %55 : vector<128xi32> to vector<1x128xi32>
    %57 = vector.broadcast %45 : i32 to vector<1x128xi32>
    %58 = arith.cmpi slt, %57, %1 : vector<1x128xi32>
    %c0_i32_18 = arith.constant 0 : i32
    %59 = vector.broadcast %c0_i32_18 : i32 to vector<1x128xi32>
    %60 = arith.cmpi sge, %56, %59 : vector<1x128xi32>
    %61 = arith.andi %60, %58 : vector<1x128xi1>
    %62 = vector.broadcast %56 : vector<1x128xi32> to vector<8x128xi32>
    %63 = arith.cmpi eq, %3, %62 : vector<8x128xi32>
    %64 = arith.andi %52, %63 : vector<8x128xi1>
    %65 = vector.broadcast %61 : vector<1x128xi1> to vector<8x128xi1>
    %66 = arith.andi %64, %65 : vector<8x128xi1>
    %67 = arith.ori %33, %66 : vector<8x128xi1>
    %68 = arith.andi %61, %27 : vector<1x128xi1>
    %c1_i32_19 = arith.constant 1 : i32
    %69 = vector.broadcast %c1_i32_19 : i32 to vector<1x128xi32>
    %70 = arith.addi %56, %69 : vector<1x128xi32>
    %71 = arith.cmpi eq, %44, %70 : vector<1x128xi32>
    %72 = arith.andi %68, %71 : vector<1x128xi1>
    %73 = arith.extui %61 : vector<1x128xi1> to vector<1x128xi32>
    %74 = arith.addi %40, %73 : vector<1x128xi32>
    %75 = arith.extui %72 : vector<1x128xi1> to vector<1x128xi32>
    %76 = arith.addi %42, %75 : vector<1x128xi32>
    %c-1000000_i32_20 = arith.constant -1000000 : i32
    %77 = vector.broadcast %c-1000000_i32_20 : i32 to vector<1x128xi32>
    %78 = arith.select %61, %56, %77 : vector<1x128xi1>, vector<1x128xi32>
    %c2_i32 = arith.constant 2 : i32
    %c7_i32_21 = arith.constant 7 : i32
    %79 = arith.subi %c7_i32_21, %c2_i32 : i32
    %80 = arith.index_cast %79 : i32 to index
    %c0_22 = arith.constant 0 : index
    %81 = vector.load %arg1[%80, %c0_22] : memref<8x128xi32, #tpu.memory_space<vmem>>, vector<1x128xi32>
    %82 = vector.broadcast %81 : vector<1x128xi32> to vector<8x128xi32>
    %83 = arith.cmpi eq, %0, %82 : vector<8x128xi32>
    %84 = arith.andi %83, %5 : vector<8x128xi1>
    %cst_23 = arith.constant dense<true> : vector<8x128xi1>
    %85 = arith.xori %67, %cst_23 : vector<8x128xi1>
    %86 = arith.andi %84, %85 : vector<8x128xi1>
    %c-1_i32_24 = arith.constant -1 : i32
    %87 = vector.broadcast %c-1_i32_24 : i32 to vector<8x128xi32>
    %88 = arith.select %86, %3, %87 : vector<8x128xi1>, vector<8x128xi32>
    %cst_25 = arith.constant dense<-2147483648> : vector<128xi32>
    %89 = vector.multi_reduction <maxsi>, %88, %cst_25 [0] : vector<8x128xi32> to vector<128xi32>
    %90 = vector.shape_cast %89 : vector<128xi32> to vector<1x128xi32>
    %91 = vector.broadcast %79 : i32 to vector<1x128xi32>
    %92 = arith.cmpi slt, %91, %1 : vector<1x128xi32>
    %c0_i32_26 = arith.constant 0 : i32
    %93 = vector.broadcast %c0_i32_26 : i32 to vector<1x128xi32>
    %94 = arith.cmpi sge, %90, %93 : vector<1x128xi32>
    %95 = arith.andi %94, %92 : vector<1x128xi1>
    %96 = vector.broadcast %90 : vector<1x128xi32> to vector<8x128xi32>
    %97 = arith.cmpi eq, %3, %96 : vector<8x128xi32>
    %98 = arith.andi %86, %97 : vector<8x128xi1>
    %99 = vector.broadcast %95 : vector<1x128xi1> to vector<8x128xi1>
    %100 = arith.andi %98, %99 : vector<8x128xi1>
    %101 = arith.ori %67, %100 : vector<8x128xi1>
    %102 = arith.andi %95, %61 : vector<1x128xi1>
    %c1_i32_27 = arith.constant 1 : i32
    %103 = vector.broadcast %c1_i32_27 : i32 to vector<1x128xi32>
    %104 = arith.addi %90, %103 : vector<1x128xi32>
    %105 = arith.cmpi eq, %78, %104 : vector<1x128xi32>
    %106 = arith.andi %102, %105 : vector<1x128xi1>
    %107 = arith.extui %95 : vector<1x128xi1> to vector<1x128xi32>
    %108 = arith.addi %74, %107 : vector<1x128xi32>
    %109 = arith.extui %106 : vector<1x128xi1> to vector<1x128xi32>
    %110 = arith.addi %76, %109 : vector<1x128xi32>
    %c-1000000_i32_28 = arith.constant -1000000 : i32
    %111 = vector.broadcast %c-1000000_i32_28 : i32 to vector<1x128xi32>
    %112 = arith.select %95, %90, %111 : vector<1x128xi1>, vector<1x128xi32>
    %c3_i32 = arith.constant 3 : i32
    %c7_i32_29 = arith.constant 7 : i32
    %113 = arith.subi %c7_i32_29, %c3_i32 : i32
    %114 = arith.index_cast %113 : i32 to index
    %c0_30 = arith.constant 0 : index
    %115 = vector.load %arg1[%114, %c0_30] : memref<8x128xi32, #tpu.memory_space<vmem>>, vector<1x128xi32>
    %116 = vector.broadcast %115 : vector<1x128xi32> to vector<8x128xi32>
    %117 = arith.cmpi eq, %0, %116 : vector<8x128xi32>
    %118 = arith.andi %117, %5 : vector<8x128xi1>
    %cst_31 = arith.constant dense<true> : vector<8x128xi1>
    %119 = arith.xori %101, %cst_31 : vector<8x128xi1>
    %120 = arith.andi %118, %119 : vector<8x128xi1>
    %c-1_i32_32 = arith.constant -1 : i32
    %121 = vector.broadcast %c-1_i32_32 : i32 to vector<8x128xi32>
    %122 = arith.select %120, %3, %121 : vector<8x128xi1>, vector<8x128xi32>
    %cst_33 = arith.constant dense<-2147483648> : vector<128xi32>
    %123 = vector.multi_reduction <maxsi>, %122, %cst_33 [0] : vector<8x128xi32> to vector<128xi32>
    %124 = vector.shape_cast %123 : vector<128xi32> to vector<1x128xi32>
    %125 = vector.broadcast %113 : i32 to vector<1x128xi32>
    %126 = arith.cmpi slt, %125, %1 : vector<1x128xi32>
    %c0_i32_34 = arith.constant 0 : i32
    %127 = vector.broadcast %c0_i32_34 : i32 to vector<1x128xi32>
    %128 = arith.cmpi sge, %124, %127 : vector<1x128xi32>
    %129 = arith.andi %128, %126 : vector<1x128xi1>
    %130 = vector.broadcast %124 : vector<1x128xi32> to vector<8x128xi32>
    %131 = arith.cmpi eq, %3, %130 : vector<8x128xi32>
    %132 = arith.andi %120, %131 : vector<8x128xi1>
    %133 = vector.broadcast %129 : vector<1x128xi1> to vector<8x128xi1>
    %134 = arith.andi %132, %133 : vector<8x128xi1>
    %135 = arith.ori %101, %134 : vector<8x128xi1>
    %136 = arith.andi %129, %95 : vector<1x128xi1>
    %c1_i32_35 = arith.constant 1 : i32
    %137 = vector.broadcast %c1_i32_35 : i32 to vector<1x128xi32>
    %138 = arith.addi %124, %137 : vector<1x128xi32>
    %139 = arith.cmpi eq, %112, %138 : vector<1x128xi32>
    %140 = arith.andi %136, %139 : vector<1x128xi1>
    %141 = arith.extui %129 : vector<1x128xi1> to vector<1x128xi32>
    %142 = arith.addi %108, %141 : vector<1x128xi32>
    %143 = arith.extui %140 : vector<1x128xi1> to vector<1x128xi32>
    %144 = arith.addi %110, %143 : vector<1x128xi32>
    %c-1000000_i32_36 = arith.constant -1000000 : i32
    %145 = vector.broadcast %c-1000000_i32_36 : i32 to vector<1x128xi32>
    %146 = arith.select %129, %124, %145 : vector<1x128xi1>, vector<1x128xi32>
    %c4_i32 = arith.constant 4 : i32
    %c7_i32_37 = arith.constant 7 : i32
    %147 = arith.subi %c7_i32_37, %c4_i32 : i32
    %148 = arith.index_cast %147 : i32 to index
    %c0_38 = arith.constant 0 : index
    %149 = vector.load %arg1[%148, %c0_38] : memref<8x128xi32, #tpu.memory_space<vmem>>, vector<1x128xi32>
    %150 = vector.broadcast %149 : vector<1x128xi32> to vector<8x128xi32>
    %151 = arith.cmpi eq, %0, %150 : vector<8x128xi32>
    %152 = arith.andi %151, %5 : vector<8x128xi1>
    %cst_39 = arith.constant dense<true> : vector<8x128xi1>
    %153 = arith.xori %135, %cst_39 : vector<8x128xi1>
    %154 = arith.andi %152, %153 : vector<8x128xi1>
    %c-1_i32_40 = arith.constant -1 : i32
    %155 = vector.broadcast %c-1_i32_40 : i32 to vector<8x128xi32>
    %156 = arith.select %154, %3, %155 : vector<8x128xi1>, vector<8x128xi32>
    %cst_41 = arith.constant dense<-2147483648> : vector<128xi32>
    %157 = vector.multi_reduction <maxsi>, %156, %cst_41 [0] : vector<8x128xi32> to vector<128xi32>
    %158 = vector.shape_cast %157 : vector<128xi32> to vector<1x128xi32>
    %159 = vector.broadcast %147 : i32 to vector<1x128xi32>
    %160 = arith.cmpi slt, %159, %1 : vector<1x128xi32>
    %c0_i32_42 = arith.constant 0 : i32
    %161 = vector.broadcast %c0_i32_42 : i32 to vector<1x128xi32>
    %162 = arith.cmpi sge, %158, %161 : vector<1x128xi32>
    %163 = arith.andi %162, %160 : vector<1x128xi1>
    %164 = vector.broadcast %158 : vector<1x128xi32> to vector<8x128xi32>
    %165 = arith.cmpi eq, %3, %164 : vector<8x128xi32>
    %166 = arith.andi %154, %165 : vector<8x128xi1>
    %167 = vector.broadcast %163 : vector<1x128xi1> to vector<8x128xi1>
    %168 = arith.andi %166, %167 : vector<8x128xi1>
    %169 = arith.ori %135, %168 : vector<8x128xi1>
    %170 = arith.andi %163, %129 : vector<1x128xi1>
    %c1_i32_43 = arith.constant 1 : i32
    %171 = vector.broadcast %c1_i32_43 : i32 to vector<1x128xi32>
    %172 = arith.addi %158, %171 : vector<1x128xi32>
    %173 = arith.cmpi eq, %146, %172 : vector<1x128xi32>
    %174 = arith.andi %170, %173 : vector<1x128xi1>
    %175 = arith.extui %163 : vector<1x128xi1> to vector<1x128xi32>
    %176 = arith.addi %142, %175 : vector<1x128xi32>
    %177 = arith.extui %174 : vector<1x128xi1> to vector<1x128xi32>
    %178 = arith.addi %144, %177 : vector<1x128xi32>
    %c-1000000_i32_44 = arith.constant -1000000 : i32
    %179 = vector.broadcast %c-1000000_i32_44 : i32 to vector<1x128xi32>
    %180 = arith.select %163, %158, %179 : vector<1x128xi1>, vector<1x128xi32>
    %c5_i32 = arith.constant 5 : i32
    %c7_i32_45 = arith.constant 7 : i32
    %181 = arith.subi %c7_i32_45, %c5_i32 : i32
    %182 = arith.index_cast %181 : i32 to index
    %c0_46 = arith.constant 0 : index
    %183 = vector.load %arg1[%182, %c0_46] : memref<8x128xi32, #tpu.memory_space<vmem>>, vector<1x128xi32>
    %184 = vector.broadcast %183 : vector<1x128xi32> to vector<8x128xi32>
    %185 = arith.cmpi eq, %0, %184 : vector<8x128xi32>
    %186 = arith.andi %185, %5 : vector<8x128xi1>
    %cst_47 = arith.constant dense<true> : vector<8x128xi1>
    %187 = arith.xori %169, %cst_47 : vector<8x128xi1>
    %188 = arith.andi %186, %187 : vector<8x128xi1>
    %c-1_i32_48 = arith.constant -1 : i32
    %189 = vector.broadcast %c-1_i32_48 : i32 to vector<8x128xi32>
    %190 = arith.select %188, %3, %189 : vector<8x128xi1>, vector<8x128xi32>
    %cst_49 = arith.constant dense<-2147483648> : vector<128xi32>
    %191 = vector.multi_reduction <maxsi>, %190, %cst_49 [0] : vector<8x128xi32> to vector<128xi32>
    %192 = vector.shape_cast %191 : vector<128xi32> to vector<1x128xi32>
    %193 = vector.broadcast %181 : i32 to vector<1x128xi32>
    %194 = arith.cmpi slt, %193, %1 : vector<1x128xi32>
    %c0_i32_50 = arith.constant 0 : i32
    %195 = vector.broadcast %c0_i32_50 : i32 to vector<1x128xi32>
    %196 = arith.cmpi sge, %192, %195 : vector<1x128xi32>
    %197 = arith.andi %196, %194 : vector<1x128xi1>
    %198 = vector.broadcast %192 : vector<1x128xi32> to vector<8x128xi32>
    %199 = arith.cmpi eq, %3, %198 : vector<8x128xi32>
    %200 = arith.andi %188, %199 : vector<8x128xi1>
    %201 = vector.broadcast %197 : vector<1x128xi1> to vector<8x128xi1>
    %202 = arith.andi %200, %201 : vector<8x128xi1>
    %203 = arith.ori %169, %202 : vector<8x128xi1>
    %204 = arith.andi %197, %163 : vector<1x128xi1>
    %c1_i32_51 = arith.constant 1 : i32
    %205 = vector.broadcast %c1_i32_51 : i32 to vector<1x128xi32>
    %206 = arith.addi %192, %205 : vector<1x128xi32>
    %207 = arith.cmpi eq, %180, %206 : vector<1x128xi32>
    %208 = arith.andi %204, %207 : vector<1x128xi1>
    %209 = arith.extui %197 : vector<1x128xi1> to vector<1x128xi32>
    %210 = arith.addi %176, %209 : vector<1x128xi32>
    %211 = arith.extui %208 : vector<1x128xi1> to vector<1x128xi32>
    %212 = arith.addi %178, %211 : vector<1x128xi32>
    %c-1000000_i32_52 = arith.constant -1000000 : i32
    %213 = vector.broadcast %c-1000000_i32_52 : i32 to vector<1x128xi32>
    %214 = arith.select %197, %192, %213 : vector<1x128xi1>, vector<1x128xi32>
    %c6_i32 = arith.constant 6 : i32
    %c7_i32_53 = arith.constant 7 : i32
    %215 = arith.subi %c7_i32_53, %c6_i32 : i32
    %216 = arith.index_cast %215 : i32 to index
    %c0_54 = arith.constant 0 : index
    %217 = vector.load %arg1[%216, %c0_54] : memref<8x128xi32, #tpu.memory_space<vmem>>, vector<1x128xi32>
    %218 = vector.broadcast %217 : vector<1x128xi32> to vector<8x128xi32>
    %219 = arith.cmpi eq, %0, %218 : vector<8x128xi32>
    %220 = arith.andi %219, %5 : vector<8x128xi1>
    %cst_55 = arith.constant dense<true> : vector<8x128xi1>
    %221 = arith.xori %203, %cst_55 : vector<8x128xi1>
    %222 = arith.andi %220, %221 : vector<8x128xi1>
    %c-1_i32_56 = arith.constant -1 : i32
    %223 = vector.broadcast %c-1_i32_56 : i32 to vector<8x128xi32>
    %224 = arith.select %222, %3, %223 : vector<8x128xi1>, vector<8x128xi32>
    %cst_57 = arith.constant dense<-2147483648> : vector<128xi32>
    %225 = vector.multi_reduction <maxsi>, %224, %cst_57 [0] : vector<8x128xi32> to vector<128xi32>
    %226 = vector.shape_cast %225 : vector<128xi32> to vector<1x128xi32>
    %227 = vector.broadcast %215 : i32 to vector<1x128xi32>
    %228 = arith.cmpi slt, %227, %1 : vector<1x128xi32>
    %c0_i32_58 = arith.constant 0 : i32
    %229 = vector.broadcast %c0_i32_58 : i32 to vector<1x128xi32>
    %230 = arith.cmpi sge, %226, %229 : vector<1x128xi32>
    %231 = arith.andi %230, %228 : vector<1x128xi1>
    %232 = vector.broadcast %226 : vector<1x128xi32> to vector<8x128xi32>
    %233 = arith.cmpi eq, %3, %232 : vector<8x128xi32>
    %234 = arith.andi %222, %233 : vector<8x128xi1>
    %235 = vector.broadcast %231 : vector<1x128xi1> to vector<8x128xi1>
    %236 = arith.andi %234, %235 : vector<8x128xi1>
    %237 = arith.ori %203, %236 : vector<8x128xi1>
    %238 = arith.andi %231, %197 : vector<1x128xi1>
    %c1_i32_59 = arith.constant 1 : i32
    %239 = vector.broadcast %c1_i32_59 : i32 to vector<1x128xi32>
    %240 = arith.addi %226, %239 : vector<1x128xi32>
    %241 = arith.cmpi eq, %214, %240 : vector<1x128xi32>
    %242 = arith.andi %238, %241 : vector<1x128xi1>
    %243 = arith.extui %231 : vector<1x128xi1> to vector<1x128xi32>
    %244 = arith.addi %210, %243 : vector<1x128xi32>
    %245 = arith.extui %242 : vector<1x128xi1> to vector<1x128xi32>
    %246 = arith.addi %212, %245 : vector<1x128xi32>
    %c-1000000_i32_60 = arith.constant -1000000 : i32
    %247 = vector.broadcast %c-1000000_i32_60 : i32 to vector<1x128xi32>
    %248 = arith.select %231, %226, %247 : vector<1x128xi1>, vector<1x128xi32>
    %c7_i32_61 = arith.constant 7 : i32
    %c7_i32_62 = arith.constant 7 : i32
    %249 = arith.subi %c7_i32_62, %c7_i32_61 : i32
    %250 = arith.index_cast %249 : i32 to index
    %c0_63 = arith.constant 0 : index
    %251 = vector.load %arg1[%250, %c0_63] : memref<8x128xi32, #tpu.memory_space<vmem>>, vector<1x128xi32>
    %252 = vector.broadcast %251 : vector<1x128xi32> to vector<8x128xi32>
    %253 = arith.cmpi eq, %0, %252 : vector<8x128xi32>
    %254 = arith.andi %253, %5 : vector<8x128xi1>
    %cst_64 = arith.constant dense<true> : vector<8x128xi1>
    %255 = arith.xori %237, %cst_64 : vector<8x128xi1>
    %256 = arith.andi %254, %255 : vector<8x128xi1>
    %c-1_i32_65 = arith.constant -1 : i32
    %257 = vector.broadcast %c-1_i32_65 : i32 to vector<8x128xi32>
    %258 = arith.select %256, %3, %257 : vector<8x128xi1>, vector<8x128xi32>
    %cst_66 = arith.constant dense<-2147483648> : vector<128xi32>
    %259 = vector.multi_reduction <maxsi>, %258, %cst_66 [0] : vector<8x128xi32> to vector<128xi32>
    %260 = vector.shape_cast %259 : vector<128xi32> to vector<1x128xi32>
    %261 = vector.broadcast %249 : i32 to vector<1x128xi32>
    %262 = arith.cmpi slt, %261, %1 : vector<1x128xi32>
    %c0_i32_67 = arith.constant 0 : i32
    %263 = vector.broadcast %c0_i32_67 : i32 to vector<1x128xi32>
    %264 = arith.cmpi sge, %260, %263 : vector<1x128xi32>
    %265 = arith.andi %264, %262 : vector<1x128xi1>
    %266 = vector.broadcast %260 : vector<1x128xi32> to vector<8x128xi32>
    %267 = arith.cmpi eq, %3, %266 : vector<8x128xi32>
    %268 = arith.andi %256, %267 : vector<8x128xi1>
    %269 = vector.broadcast %265 : vector<1x128xi1> to vector<8x128xi1>
    %270 = arith.andi %268, %269 : vector<8x128xi1>
    %271 = arith.ori %237, %270 : vector<8x128xi1>
    %272 = arith.andi %265, %231 : vector<1x128xi1>
    %c1_i32_68 = arith.constant 1 : i32
    %273 = vector.broadcast %c1_i32_68 : i32 to vector<1x128xi32>
    %274 = arith.addi %260, %273 : vector<1x128xi32>
    %275 = arith.cmpi eq, %248, %274 : vector<1x128xi32>
    %276 = arith.andi %272, %275 : vector<1x128xi1>
    %277 = arith.extui %265 : vector<1x128xi1> to vector<1x128xi32>
    %278 = arith.addi %244, %277 : vector<1x128xi32>
    %279 = arith.extui %276 : vector<1x128xi1> to vector<1x128xi32>
    %280 = arith.addi %246, %279 : vector<1x128xi32>
    %c-1000000_i32_69 = arith.constant -1000000 : i32
    %281 = vector.broadcast %c-1000000_i32_69 : i32 to vector<1x128xi32>
    %282 = arith.select %265, %260, %281 : vector<1x128xi1>, vector<1x128xi32>
    %c8_i32 = arith.constant 8 : i32
    %283 = arith.sitofp %278 : vector<1x128xi32> to vector<1x128xf32>
    %c1_i32_70 = arith.constant 1 : i32
    %284 = vector.broadcast %c1_i32_70 : i32 to vector<1x128xi32>
    %285 = arith.maxsi %1, %284 : vector<1x128xi32>
    %286 = arith.sitofp %285 : vector<1x128xi32> to vector<1x128xf32>
    %c1_i32_71 = arith.constant 1 : i32
    %287 = vector.broadcast %c1_i32_71 : i32 to vector<1x128xi32>
    %288 = arith.maxsi %2, %287 : vector<1x128xi32>
    %289 = arith.sitofp %288 : vector<1x128xi32> to vector<1x128xf32>
    %290 = arith.divf %283, %286 : vector<1x128xf32>
    %291 = arith.divf %283, %289 : vector<1x128xf32>
    %cst_72 = arith.constant 0.899999976 : f32
    %292 = vector.broadcast %cst_72 : f32 to vector<1x128xf32>
    %293 = arith.mulf %292, %290 : vector<1x128xf32>
    %cst_73 = arith.constant 1.000000e-01 : f32
    %294 = vector.broadcast %cst_73 : f32 to vector<1x128xf32>
    %295 = arith.mulf %294, %291 : vector<1x128xf32>
    %296 = arith.addf %293, %295 : vector<1x128xf32>
    %cst_74 = arith.constant 1.000000e-30 : f32
    %297 = vector.broadcast %cst_74 : f32 to vector<1x128xf32>
    %298 = arith.maximumf %296, %297 : vector<1x128xf32>
    %299 = arith.mulf %290, %291 : vector<1x128xf32>
    %300 = arith.divf %299, %298 : vector<1x128xf32>
    %301 = arith.subi %278, %280 : vector<1x128xi32>
    %302 = arith.sitofp %301 : vector<1x128xi32> to vector<1x128xf32>
    %cst_75 = arith.constant 1.000000e+00 : f32
    %303 = vector.broadcast %cst_75 : f32 to vector<1x128xf32>
    %304 = arith.maximumf %283, %303 : vector<1x128xf32>
    %305 = arith.divf %302, %304 : vector<1x128xf32>
    %cst_76 = arith.constant 5.000000e-01 : f32
    %306 = vector.broadcast %cst_76 : f32 to vector<1x128xf32>
    %307 = arith.mulf %306, %305 : vector<1x128xf32>
    %308 = arith.mulf %307, %305 : vector<1x128xf32>
    %309 = arith.mulf %308, %305 : vector<1x128xf32>
    %c0_i32_77 = arith.constant 0 : i32
    %310 = vector.broadcast %c0_i32_77 : i32 to vector<1x128xi32>
    %311 = arith.cmpi sgt, %278, %310 : vector<1x128xi32>
    %cst_78 = arith.constant 1.000000e+00 : f32
    %312 = vector.broadcast %cst_78 : f32 to vector<1x128xf32>
    %313 = arith.subf %312, %309 : vector<1x128xf32>
    %314 = arith.mulf %313, %300 : vector<1x128xf32>
    %cst_79 = arith.constant 0.000000e+00 : f32
    %315 = vector.broadcast %cst_79 : f32 to vector<1x128xf32>
    %316 = arith.select %311, %314, %315 : vector<1x128xi1>, vector<1x128xf32>
    %c0_80 = arith.constant 0 : index
    %c0_81 = arith.constant 0 : index
    %317 = vector.load %arg5[%c0_80, %c0_81] : memref<1x128xf32, #tpu.memory_space<vmem>>, vector<1x128xf32>
    tpu.vector_store %arg5[%c0_80, %c0_81], %316 {strides = array<i32>} : memref<1x128xf32, #tpu.memory_space<vmem>>, vector<1x128xf32>,
    return
  }
  func.func @transform_0(%arg0: i32) -> (i32, i32) {
    %c0_i32 = arith.constant 0 : i32
    %c0_i32_0 = arith.constant 0 : i32
    return %c0_i32, %arg0 : i32, i32
  }
  func.func @transform_1(%arg0: i32) -> (i32, i32) {
    %c0_i32 = arith.constant 0 : i32
    %c0_i32_0 = arith.constant 0 : i32
    return %c0_i32, %arg0 : i32, i32
  }
  func.func @transform_2(%arg0: i32) -> (i32, i32) {
    %c0_i32 = arith.constant 0 : i32
    %c0_i32_0 = arith.constant 0 : i32
    return %c0_i32, %arg0 : i32, i32
  }
  func.func @transform_3(%arg0: i32) -> (i32, i32) {
    %c0_i32 = arith.constant 0 : i32
    %c0_i32_0 = arith.constant 0 : i32
    return %c0_i32, %arg0 : i32, i32
  }
  func.func @transform_4(%arg0: i32) -> (i32, i32) {
    %c0_i32 = arith.constant 0 : i32
    %c0_i32_0 = arith.constant 0 : i32
    return %c0_i32, %arg0 : i32, i32
  }
}

</mosaic_0001>

<llo_original>
// kernel: _meteor_scores_impl.1
$region0: #{_meteor_scores_impl.1}
  #allocation0 [shape = 'u32[]', space=smem, size = 0x4, offset = 0x4, fixed_abs, tag = 'smem constant byte address 0x4 - core index']
  #allocation1 [shape = 'u32[144,128]{1,0:T(1,128)}', space=vmem, size = 0x12000, scoped, tag = 'internal scratch']
  %s0 = inlined_call_operand.vmem [shape: s32[8,128], index: 0, kind: input, shape index: {}]
  %s1 = inlined_call_operand.vmem [shape: s32[8,128], index: 1, kind: input, shape index: {}]
  %s2 = inlined_call_operand.vmem [shape: s32[1,128], index: 2, kind: input, shape index: {}]
  %s3 = inlined_call_operand.vmem [shape: s32[1,128], index: 3, kind: input, shape index: {}]
  %s4 = inlined_call_operand.vmem [shape: f32[1,128], index: 4, kind: output, shape index: {}]
  %s5 = sld [smem:[#allocation0]]
  $region26: #{_meteor_scores_impl.1} parent=0
    _
  %s7 = ssub.s32 1, %s5
  %s8 = scalar_select 0, %s7, %s5
  // Predicated region
  $region2: #{_meteor_scores_impl.1} parent=0 // pred_check
    _
  $region3: #{_meteor_scores_impl.1} parent=0 // pred_check_branch
    %10 = sbr.rel (0) target = $region5
  $region4: #{_meteor_scores_impl.1} parent=0 // pred_region
    _
  $region5: #{_meteor_scores_impl.1} parent=0 // pred_fallthru
    _
  // Predicated region
  $region6: #{_meteor_scores_impl.1} parent=0 // pred_check
    _
  $region7: #{_meteor_scores_impl.1} parent=0 // pred_check_branch
    %12 = sbr.rel (0) target = $region9
  $region8: #{_meteor_scores_impl.1} parent=0 // pred_region
    _
  $region9: #{_meteor_scores_impl.1} parent=0 // pred_fallthru
    _
  // Predicated region
  $region10: #{_meteor_scores_impl.1} parent=0 // pred_check
    _
  $region11: #{_meteor_scores_impl.1} parent=0 // pred_check_branch
    %14 = sbr.rel (0) target = $region13
  $region12: #{_meteor_scores_impl.1} parent=0 // pred_region
    _
  $region13: #{_meteor_scores_impl.1} parent=0 // pred_fallthru
    _
  // Predicated region
  $region14: #{_meteor_scores_impl.1} parent=0 // pred_check
    _
  $region15: #{_meteor_scores_impl.1} parent=0 // pred_check_branch
    %16 = sbr.rel (0) target = $region17
  $region16: #{_meteor_scores_impl.1} parent=0 // pred_region
    _
  $region17: #{_meteor_scores_impl.1} parent=0 // pred_fallthru
    _
  %v17 = vld [vmem:[%s1] sm:$0xff]
  %v18 = vld [vmem:[%s2] sm:$0x1]
  %v19 = vld [vmem:[%s3] sm:$0x1]
  %v20 = vlaneseq
  %v21 = vshrl.u32 %v20, 7
  %v22 = vlaneseq
  %v23 = vshrl.u32 %v22, 7
  %v24 = vsub.s32 0, %v23
  %v25 = vrot.slane %v19, %v24
  %vm26 = vcmp.lt.s32.totalorder %v21, %v25
  %v27 = vld [vmem:[%s0 + $0x7] sm:$0x1]
  %v28 = vlaneseq
  %v29 = vshrl.u32 %v28, 7
  %v30 = vsub.s32 0, %v29
  %v31 = vrot.slane %v27, %v30
  %vm32 = vcmp.eq.s32.totalorder %v17, %v31
  %vm33 = vmand %vm32, %vm26
  %v34 = vsel %vm33, %v21, 4294967295
  %v35 = vrot.slane %v34, 4
  %vm36 = vcmp.gt.s32.totalorder %v34, %v35
  %v37 = vsel %vm36, %v34, %v35
  %v38 = vrot.slane %v37, 2
  %vm39 = vcmp.gt.s32.totalorder %v37, %v38
  %v40 = vsel %vm39, %v37, %v38
  %v41 = vrot.slane %v40, 1
  %vm42 = vcmp.gt.s32.totalorder %v40, %v41
  %v43 = vsel %vm42, %v40, %v41
  %vm44 = vcmp.gt.s32.totalorder %v18, 7
  %vm45 = vcmp.ge.s32.totalorder %v43, 0
  %vm46 = vmand %vm45, %vm44
  %vm47 = vcmp.eq.s32.totalorder %v21, %v43
  %vm48 = vmand %vm33, %vm47
  %v49 = vsel %vm46, 1, 0
  %v50 = vlaneseq
  %v51 = vshrl.u32 %v50, 7
  %v52 = vsub.s32 0, %v51
  %v53 = vrot.slane %v49, %v52
  %vm54 = vcmp.eq.s32.totalorder %v53, 1
  %vm55 = vmand %vm48, %vm54
  %v56 = vsel %vm46, %v43, 4293967296
  %v57 = vld [vmem:[%s0 + $0x6] sm:$0x1]
  %v58 = vlaneseq
  %v59 = vshrl.u32 %v58, 7
  %v60 = vsub.s32 0, %v59
  %v61 = vrot.slane %v57, %v60
  %vm62 = vcmp.eq.s32.totalorder %v17, %v61
  %vm63 = vmand %vm62, %vm26
  %vm64 = vmxor %vm55, 1
  %vm65 = vmand %vm63, %vm64
  %v66 = vsel %vm65, %v21, 4294967295
  %v67 = vrot.slane %v66, 4
  %vm68 = vcmp.gt.s32.totalorder %v66, %v67
  %v69 = vsel %vm68, %v66, %v67
  %v70 = vrot.slane %v69, 2
  %vm71 = vcmp.gt.s32.totalorder %v69, %v70
  %v72 = vsel %vm71, %v69, %v70
  %v73 = vrot.slane %v72, 1
  %vm74 = vcmp.gt.s32.totalorder %v72, %v73
  %v75 = vsel %vm74, %v72, %v73
  %vm76 = vcmp.gt.s32.totalorder %v18, 6
  %vm77 = vcmp.ge.s32.totalorder %v75, 0
  %vm78 = vmand %vm77, %vm76
  %vm79 = vcmp.eq.s32.totalorder %v21, %v75
  %vm80 = vmand %vm65, %vm79
  %v81 = vsel %vm78, 1, 0
  %v82 = vlaneseq
  %v83 = vshrl.u32 %v82, 7
  %v84 = vsub.s32 0, %v83
  %v85 = vrot.slane %v81, %v84
  %vm86 = vcmp.eq.s32.totalorder %v85, 1
  %vm87 = vmand %vm80, %vm86
  %vm88 = vmor %vm55, %vm87
  %vm89 = vmand %vm78, %vm46
  %v90 = vadd.s32 %v75, 1
  %vm91 = vcmp.eq.s32.totalorder %v56, %v90
  %vm92 = vmand %vm89, %vm91
  %v93 = vadd.s32 %v49, %v81
  %v94 = vsel %vm92, 1, 0
  %v95 = vsel %vm78, %v75, 4293967296
  %v96 = vld [vmem:[%s0 + $0x5] sm:$0x1]
  %v97 = vlaneseq
  %v98 = vshrl.u32 %v97, 7
  %v99 = vsub.s32 0, %v98
  %v100 = vrot.slane %v96, %v99
  %vm101 = vcmp.eq.s32.totalorder %v17, %v100
  %vm102 = vmand %vm101, %vm26
  %vm103 = vmxor %vm88, 1
  %vm104 = vmand %vm102, %vm103
  %v105 = vsel %vm104, %v21, 4294967295
  %v106 = vrot.slane %v105, 4
  %vm107 = vcmp.gt.s32.totalorder %v105, %v106
  %v108 = vsel %vm107, %v105, %v106
  %v109 = vrot.slane %v108, 2
  %vm110 = vcmp.gt.s32.totalorder %v108, %v109
  %v111 = vsel %vm110, %v108, %v109
  %v112 = vrot.slane %v111, 1
  %vm113 = vcmp.gt.s32.totalorder %v111, %v112
  %v114 = vsel %vm113, %v111, %v112
  %vm115 = vcmp.gt.s32.totalorder %v18, 5
  %vm116 = vcmp.ge.s32.totalorder %v114, 0
  %vm117 = vmand %vm116, %vm115
  %vm118 = vcmp.eq.s32.totalorder %v21, %v114
  %vm119 = vmand %vm104, %vm118
  %v120 = vsel %vm117, 1, 0
  %v121 = vlaneseq
  %v122 = vshrl.u32 %v121, 7
  %v123 = vsub.s32 0, %v122
  %v124 = vrot.slane %v120, %v123
  %vm125 = vcmp.eq.s32.totalorder %v124, 1
  %vm126 = vmand %vm119, %vm125
  %vm127 = vmor %vm88, %vm126
  %vm128 = vmand %vm117, %vm78
  %v129 = vadd.s32 %v114, 1
  %vm130 = vcmp.eq.s32.totalorder %v95, %v129
  %vm131 = vmand %vm128, %vm130
  %v132 = vadd.s32 %v93, %v120
  %v133 = vsel %vm131, 1, 0
  %v134 = vadd.s32 %v94, %v133
  %v135 = vsel %vm117, %v114, 4293967296
  %v136 = vld [vmem:[%s0 + $0x4] sm:$0x1]
  %v137 = vlaneseq
  %v138 = vshrl.u32 %v137, 7
  %v139 = vsub.s32 0, %v138
  %v140 = vrot.slane %v136, %v139
  %vm141 = vcmp.eq.s32.totalorder %v17, %v140
  %vm142 = vmand %vm141, %vm26
  %vm143 = vmxor %vm127, 1
  %vm144 = vmand %vm142, %vm143
  %v145 = vsel %vm144, %v21, 4294967295
  %v146 = vrot.slane %v145, 4
  %vm147 = vcmp.gt.s32.totalorder %v145, %v146
  %v148 = vsel %vm147, %v145, %v146
  %v149 = vrot.slane %v148, 2
  %vm150 = vcmp.gt.s32.totalorder %v148, %v149
  %v151 = vsel %vm150, %v148, %v149
  %v152 = vrot.slane %v151, 1
  %vm153 = vcmp.gt.s32.totalorder %v151, %v152
  %v154 = vsel %vm153, %v151, %v152
  %vm155 = vcmp.gt.s32.totalorder %v18, 4
  %vm156 = vcmp.ge.s32.totalorder %v154, 0
  %vm157 = vmand %vm156, %vm155
  %vm158 = vcmp.eq.s32.totalorder %v21, %v154
  %vm159 = vmand %vm144, %vm158
  %v160 = vsel %vm157, 1, 0
  %v161 = vlaneseq
  %v162 = vshrl.u32 %v161, 7
  %v163 = vsub.s32 0, %v162
  %v164 = vrot.slane %v160, %v163
  %vm165 = vcmp.eq.s32.totalorder %v164, 1
  %vm166 = vmand %vm159, %vm165
  %vm167 = vmor %vm127, %vm166
  %vm168 = vmand %vm157, %vm117
  %v169 = vadd.s32 %v154, 1
  %vm170 = vcmp.eq.s32.totalorder %v135, %v169
  %vm171 = vmand %vm168, %vm170
  %v172 = vadd.s32 %v132, %v160
  %v173 = vsel %vm171, 1, 0
  %v174 = vadd.s32 %v134, %v173
  %v175 = vsel %vm157, %v154, 4293967296
  %v176 = vld [vmem:[%s0 + $0x3] sm:$0x1]
  %v177 = vlaneseq
  %v178 = vshrl.u32 %v177, 7
  %v179 = vsub.s32 0, %v178
  %v180 = vrot.slane %v176, %v179
  %vm181 = vcmp.eq.s32.totalorder %v17, %v180
  %vm182 = vmand %vm181, %vm26
  %vm183 = vmxor %vm167, 1
  %vm184 = vmand %vm182, %vm183
  %v185 = vsel %vm184, %v21, 4294967295
  %v186 = vrot.slane %v185, 4
  %vm187 = vcmp.gt.s32.totalorder %v185, %v186
  %v188 = vsel %vm187, %v185, %v186
  %v189 = vrot.slane %v188, 2
  %vm190 = vcmp.gt.s32.totalorder %v188, %v189
  %v191 = vsel %vm190, %v188, %v189
  %v192 = vrot.slane %v191, 1
  %vm193 = vcmp.gt.s32.totalorder %v191, %v192
  %v194 = vsel %vm193, %v191, %v192
  %vm195 = vcmp.gt.s32.totalorder %v18, 3
  %vm196 = vcmp.ge.s32.totalorder %v194, 0
  %vm197 = vmand %vm196, %vm195
  %vm198 = vcmp.eq.s32.totalorder %v21, %v194
  %vm199 = vmand %vm184, %vm198
  %v200 = vsel %vm197, 1, 0
  %v201 = vlaneseq
  %v202 = vshrl.u32 %v201, 7
  %v203 = vsub.s32 0, %v202
  %v204 = vrot.slane %v200, %v203
  %vm205 = vcmp.eq.s32.totalorder %v204, 1
  %vm206 = vmand %vm199, %vm205
  %vm207 = vmor %vm167, %vm206
  %vm208 = vmand %vm197, %vm157
  %v209 = vadd.s32 %v194, 1
  %vm210 = vcmp.eq.s32.totalorder %v175, %v209
  %vm211 = vmand %vm208, %vm210
  %v212 = vadd.s32 %v172, %v200
  %v213 = vsel %vm211, 1, 0
  %v214 = vadd.s32 %v174, %v213
  %v215 = vsel %vm197, %v194, 4293967296
  %v216 = vld [vmem:[%s0 + $0x2] sm:$0x1]
  %v217 = vlaneseq
  %v218 = vshrl.u32 %v217, 7
  %v219 = vsub.s32 0, %v218
  %v220 = vrot.slane %v216, %v219
  %vm221 = vcmp.eq.s32.totalorder %v17, %v220
  %vm222 = vmand %vm221, %vm26
  %vm223 = vmxor %vm207, 1
  %vm224 = vmand %vm222, %vm223
  %v225 = vsel %vm224, %v21, 4294967295
  %v226 = vrot.slane %v225, 4
  %vm227 = vcmp.gt.s32.totalorder %v225, %v226
  %v228 = vsel %vm227, %v225, %v226
  %v229 = vrot.slane %v228, 2
  %vm230 = vcmp.gt.s32.totalorder %v228, %v229
  %v231 = vsel %vm230, %v228, %v229
  %v232 = vrot.slane %v231, 1
  %vm233 = vcmp.gt.s32.totalorder %v231, %v232
  %v234 = vsel %vm233, %v231, %v232
  %vm235 = vcmp.gt.s32.totalorder %v18, 2
  %vm236 = vcmp.ge.s32.totalorder %v234, 0
  %vm237 = vmand %vm236, %vm235
  %vm238 = vcmp.eq.s32.totalorder %v21, %v234
  %vm239 = vmand %vm224, %vm238
  %v240 = vsel %vm237, 1, 0
  %v241 = vlaneseq
  %v242 = vshrl.u32 %v241, 7
  %v243 = vsub.s32 0, %v242
  %v244 = vrot.slane %v240, %v243
  %vm245 = vcmp.eq.s32.totalorder %v244, 1
  %vm246 = vmand %vm239, %vm245
  %vm247 = vmor %vm207, %vm246
  %vm248 = vmand %vm237, %vm197
  %v249 = vadd.s32 %v234, 1
  %vm250 = vcmp.eq.s32.totalorder %v215, %v249
  %vm251 = vmand %vm248, %vm250
  %v252 = vadd.s32 %v212, %v240
  %v253 = vsel %vm251, 1, 0
  %v254 = vadd.s32 %v214, %v253
  %v255 = vsel %vm237, %v234, 4293967296
  %v256 = vld [vmem:[%s0 + $0x1] sm:$0x1]
  %v257 = vlaneseq
  %v258 = vshrl.u32 %v257, 7
  %v259 = vsub.s32 0, %v258
  %v260 = vrot.slane %v256, %v259
  %vm261 = vcmp.eq.s32.totalorder %v17, %v260
  %vm262 = vmand %vm261, %vm26
  %vm263 = vmxor %vm247, 1
  %vm264 = vmand %vm262, %vm263
  %v265 = vsel %vm264, %v21, 4294967295
  %v266 = vrot.slane %v265, 4
  %vm267 = vcmp.gt.s32.totalorder %v265, %v266
  %v268 = vsel %vm267, %v265, %v266
  %v269 = vrot.slane %v268, 2
  %vm270 = vcmp.gt.s32.totalorder %v268, %v269
  %v271 = vsel %vm270, %v268, %v269
  %v272 = vrot.slane %v271, 1
  %vm273 = vcmp.gt.s32.totalorder %v271, %v272
  %v274 = vsel %vm273, %v271, %v272
  %vm275 = vcmp.gt.s32.totalorder %v18, 1
  %vm276 = vcmp.ge.s32.totalorder %v274, 0
  %vm277 = vmand %vm276, %vm275
  %vm278 = vcmp.eq.s32.totalorder %v21, %v274
  %vm279 = vmand %vm264, %vm278
  %v280 = vsel %vm277, 1, 0
  %v281 = vlaneseq
  %v282 = vshrl.u32 %v281, 7
  %v283 = vsub.s32 0, %v282
  %v284 = vrot.slane %v280, %v283
  %vm285 = vcmp.eq.s32.totalorder %v284, 1
  %vm286 = vmand %vm279, %vm285
  %vm287 = vmor %vm247, %vm286
  %vm288 = vmand %vm277, %vm237
  %v289 = vadd.s32 %v274, 1
  %vm290 = vcmp.eq.s32.totalorder %v255, %v289
  %vm291 = vmand %vm288, %vm290
  %v292 = vadd.s32 %v252, %v280
  %v293 = vsel %vm291, 1, 0
  %v294 = vadd.s32 %v254, %v293
  %v295 = vsel %vm277, %v274, 4293967296
  %v296 = vld [vmem:[%s0] sm:$0x1]
  %v297 = vlaneseq
  %v298 = vshrl.u32 %v297, 7
  %v299 = vsub.s32 0, %v298
  %v300 = vrot.slane %v296, %v299
  %vm301 = vcmp.eq.s32.totalorder %v17, %v300
  %vm302 = vmand %vm301, %vm26
  %vm303 = vmxor %vm287, 1
  %vm304 = vmand %vm302, %vm303
  %v305 = vsel %vm304, %v21, 4294967295
  %v306 = vrot.slane %v305, 4
  %vm307 = vcmp.gt.s32.totalorder %v305, %v306
  %v308 = vsel %vm307, %v305, %v306
  %v309 = vrot.slane %v308, 2
  %vm310 = vcmp.gt.s32.totalorder %v308, %v309
  %v311 = vsel %vm310, %v308, %v309
  %v312 = vrot.slane %v311, 1
  %vm313 = vcmp.gt.s32.totalorder %v311, %v312
  %v314 = vsel %vm313, %v311, %v312
  %vm315 = vcmp.gt.s32.totalorder %v18, 0
  %vm316 = vcmp.ge.s32.totalorder %v314, 0
  %vm317 = vmand %vm316, %vm315
  %vm318 = vmand %vm317, %vm277
  %v319 = vadd.s32 %v314, 1
  %vm320 = vcmp.eq.s32.totalorder %v295, %v319
  %vm321 = vmand %vm318, %vm320
  %v322 = vsel %vm317, 1, 0
  %v323 = vadd.s32 %v292, %v322
  %v324 = vsel %vm321, 1, 0
  %v325 = vadd.s32 %v294, %v324
  %v326 = vcvt.s32.f32 %v323
  %vm327 = vcmp.gt.s32.totalorder %v18, 1
  %v328 = vsel %vm327, %v18, 1
  %v329 = vcvt.s32.f32 %v328
  %vm330 = vcmp.gt.s32.totalorder %v19, 1
  %v331 = vsel %vm330, %v19, 1
  %v332 = vcvt.s32.f32 %v331
  %v333 = vrcp.pop %v329
  %v334 = vmul.f32 %v326, %v333
  %v335 = vrcp.pop %v332
  %v336 = vmul.f32 %v326, %v335
  %v337 = vmul.f32 %v334, 0.9
  %v338 = vmul.f32 %v336, 0.1
  %v339 = vadd.f32 %v337, %v338
  %v340 = vmax.f32 %v339, 1e-30
  %v341 = vmul.f32 %v334, %v336
  %v342 = vrcp.pop %v340
  %v343 = vmul.f32 %v341, %v342
  %v344 = vsub.s32 %v323, %v325
  %v345 = vcvt.s32.f32 %v344
  %v346 = vmax.f32 %v326, 1.0
  %v347 = vrcp.pop %v346
  %v348 = vmul.f32 %v345, %v347
  %v349 = vmul.f32 %v348, 0.5
  %v350 = vmul.f32 %v349, %v348
  %v351 = vmul.f32 %v350, %v348
  %vm352 = vcmp.gt.s32.totalorder %v323, 0
  %v353 = vsub.f32 1.0, %v351
  %v354 = vmul.f32 %v353, %v343
  %v355 = vsel %vm352, %v354, 0.0
  %356 = vst [vmem:[%s4] sm:$0x1] %v355
  // Predicated region
  $region18: #{_meteor_scores_impl.1} parent=0 // pred_check
    _
  $region19: #{_meteor_scores_impl.1} parent=0 // pred_check_branch
    %358 = sbr.rel (0) target = $region21
  $region20: #{_meteor_scores_impl.1} parent=0 // pred_region
    _
  $region21: #{_meteor_scores_impl.1} parent=0 // pred_fallthru
    _
  // Predicated region
  $region22: #{_meteor_scores_impl.1} parent=0 // pred_check
    _
  $region23: #{_meteor_scores_impl.1} parent=0 // pred_check_branch
    %360 = sbr.rel (0) target = $region25
  $region24: #{_meteor_scores_impl.1} parent=0 // pred_region
    _
  $region25: #{_meteor_scores_impl.1} parent=0 // pred_fallthru
    _

</llo_original>
